<compile_context>
chip_gen: v6e
topology: v6e:2x2x1
jax: 0.10.0
libtpu: 0.0.40
codegen_flags: <defaults>
</compile_context>

<pallas_src>
import functools

import jax
import jax.numpy as jnp
from jax.experimental import pallas as pl
from jax.experimental.pallas import tpu as pltpu

BN_EPS = 1e-5          # nn.BatchNorm1d default
_NSPLIT = 2            # stats partial split (maps onto the 2 TensorCores on v7x)


def _cdiv(a, b):
    return -(-a // b)


def _ceil_to(a, b):
    return _cdiv(a, b) * b


def _vmem_capacity_bytes():
    try:
        return int(pltpu.get_tpu_info().vmem_capacity_bytes)
    except Exception:
        return 64 * 1024 * 1024  # conservative default (v7x)


# --------------------------- in-kernel helpers ----------------------------- #

def _scale_shift_from_stats(lane_sum, lane_ssq, gamma, beta, *, n_rows, group, fold):
    """(1, c_lane) batch-norm scale/shift from per-lane sums.

    When rows are folded into lanes (fold > 1), each channel occupies `fold`
    lane groups of width `group`; a log2(fold) rotate-add tree (XLU slot,
    essentially free) gives every lane the full per-channel totals.
    """
    shift_amt = (group * fold) // 2
    while shift_amt >= group:
        lane_sum = lane_sum + pltpu.roll(lane_sum, shift_amt, axis=1)
        lane_ssq = lane_ssq + pltpu.roll(lane_ssq, shift_amt, axis=1)
        shift_amt //= 2
    inv_n = jnp.float32(1.0 / n_rows)
    mean = lane_sum * inv_n
    var = jnp.maximum(lane_ssq * inv_n - mean * mean, 0.0)
    # TODO(synk): E[x^2]-E[x]^2 in f32 can lose precision when |mean| >> std; a
    # centered second pass would cost the same HBM traffic if ever required.
    scale = gamma * jax.lax.rsqrt(var + BN_EPS)
    shift = beta - mean * scale
    return scale, shift


# ------------------------------- kernels ----------------------------------- #

def _bn_stats_kernel(x_ref, sum_ref, ssq_ref, *, r, tile_r, nt_split, needs_mask):
    """Accumulate per-(split, sublane, lane) partial sums over row tiles."""
    s = pl.program_id(0)          # split index ('parallel': one per TC on v7x)
    t = pl.program_id(1)          # tile index within the split ('arbitrary')

    @pl.when(t == 0)
    def _():
        sum_ref[...] = jnp.zeros_like(sum_ref)
        ssq_ref[...] = jnp.zeros_like(ssq_ref)

    x = x_ref[...].astype(jnp.float32)                     # (tile_r, c_lane)
    if needs_mask:                                         # trace-time switch
        g = s * nt_split + t                               # global tile index
        row = g * tile_r + jax.lax.broadcasted_iota(jnp.int32, x.shape, 0)
        x = jnp.where(row < r, x, 0.0)
    # sublane-aligned view: reduce to 8 partial accumulators per lane (pure
    # vreg adds; final 8->1 reduce happens in the consumer)
    xs = x.reshape(tile_r // 8, 8, x.shape[-1])
    sum_ref[...] += jnp.sum(xs, axis=0)                    # (8, c_lane)
    ssq_ref[...] += jnp.sum(xs * xs, axis=0)


def _bn_apply_kernel(x_ref, sum_ref, ssq_ref, gamma_ref, beta_ref, o_ref, *,
                     n_rows, group, fold):
    """y = x*scale + shift; scale/shift derived in-kernel from raw partials."""
    lane_sum = jnp.sum(sum_ref[...], axis=0, keepdims=True)   # (1, c_lane)
    lane_ssq = jnp.sum(ssq_ref[...], axis=0, keepdims=True)
    scale, shift = _scale_shift_from_stats(
        lane_sum, lane_ssq, gamma_ref[...], beta_ref[...],
        n_rows=n_rows, group=group, fold=fold)
    x = x_ref[...].astype(jnp.float32)
    o_ref[...] = (x * scale + shift).astype(o_ref.dtype)


def _bn_fused_kernel(x_ref, gamma_ref, beta_ref, extra_ref, o_ref,
                     scale_ref, shift_ref, *, n_rows, group, fold):
    """Single-read path: stats + scale/shift + normalize on a VMEM-resident x."""
    x = x_ref[...].astype(jnp.float32)
    lane_sum = jnp.sum(x, axis=0, keepdims=True) + extra_ref[0:1, :]
    lane_ssq = jnp.sum(x * x, axis=0, keepdims=True) + extra_ref[1:2, :]
    scale, shift = _scale_shift_from_stats(
        lane_sum, lane_ssq, gamma_ref[...], beta_ref[...],
        n_rows=n_rows, group=group, fold=fold)
    o_ref[...] = (x * scale + shift).astype(o_ref.dtype)
    scale_ref[...] = scale                     # exported for the tiny JAX tail
    shift_ref[...] = shift


def _bias_kernel(x_ref, b_ref, o_ref):
    """use_bn=False path: y = x + bias (bias pre-tiled across folded lanes)."""
    o_ref[...] = (x_ref[...].astype(jnp.float32) + b_ref[...]).astype(o_ref.dtype)


# --------------------------- pallas_call wrappers --------------------------- #

def _pick_tile(r, c_lane, itemsize, vmem_cap):
    """Biggest row tile whose double-buffered in+out footprint fits the budget."""
    tile_bytes = max(vmem_cap // 16, 2 * 1024 * 1024)   # ~4 MiB v7x, ~8 MiB v5e/v6e
    tile_r_max = max(8, (tile_bytes // (c_lane * itemsize)) // 8 * 8)
    nt = _cdiv(r, tile_r_max)
    tile_r = _ceil_to(_cdiv(r, nt), 8)                   # balanced tiles
    if tile_r > r:                                       # tiny r (forced path only)
        tile_r = max(8, (r // 8) * 8)
    nt = _cdiv(r, tile_r)
    return tile_r, nt


def _bn_stats(xf, tile_r, nt, vmem_limit):
    r, c_lane = xf.shape
    nt_split = _cdiv(nt, _NSPLIT)
    needs_mask = (r % tile_r != 0) or (_NSPLIT * nt_split != nt)
    last = nt - 1
    kernel = functools.partial(_bn_stats_kernel, r=r, tile_r=tile_r,
                               nt_split=nt_split, needs_mask=needs_mask)

    def x_map(s, t):
        return (jnp.minimum(s * nt_split + t, last), 0)

    out_map = lambda s, t: (s, 0)
    itemsize = jnp.dtype(xf.dtype).itemsize
    return pl.pallas_call(
        kernel,
        out_shape=(jax.ShapeDtypeStruct((_NSPLIT * 8, c_lane), jnp.float32),
                   jax.ShapeDtypeStruct((_NSPLIT * 8, c_lane), jnp.float32)),
        grid=(_NSPLIT, nt_split),
        in_specs=[pl.BlockSpec((tile_r, c_lane), x_map)],
        out_specs=(pl.BlockSpec((8, c_lane), out_map),
                   pl.BlockSpec((8, c_lane), out_map)),
        compiler_params=pltpu.CompilerParams(
            dimension_semantics=("parallel", "arbitrary"),
            vmem_limit_bytes=vmem_limit),
        cost_estimate=pl.CostEstimate(
            flops=3 * r * c_lane, transcendentals=0,
            bytes_accessed=r * c_lane * itemsize + 2 * _NSPLIT * 8 * c_lane * 4),
    )(xf)


def _bn_apply(xf, sums, ssqs, gamma_lane, beta_lane, *, n_rows, group, fold,
              tile_r, nt, vmem_limit, out_dtype):
    r, c_lane = xf.shape
    kernel = functools.partial(_bn_apply_kernel, n_rows=n_rows, group=group, fold=fold)
    itemsize = jnp.dtype(xf.dtype).itemsize
    out_itemsize = jnp.dtype(out_dtype).itemsize
    return pl.pallas_call(
        kernel,
        out_shape=jax.ShapeDtypeStruct((r, c_lane), out_dtype),
        grid=(nt,),
        in_specs=[pl.BlockSpec((tile_r, c_lane), lambda i: (i, 0)),
                  pl.BlockSpec(sums.shape, lambda i: (0, 0)),
                  pl.BlockSpec(ssqs.shape, lambda i: (0, 0)),
                  pl.BlockSpec((1, c_lane), lambda i: (0, 0)),
                  pl.BlockSpec((1, c_lane), lambda i: (0, 0))],
        out_specs=pl.BlockSpec((tile_r, c_lane), lambda i: (i, 0)),
        compiler_params=pltpu.CompilerParams(
            dimension_semantics=("parallel",),
            vmem_limit_bytes=vmem_limit),
        cost_estimate=pl.CostEstimate(
            flops=2 * r * c_lane, transcendentals=nt,
            bytes_accessed=r * c_lane * (itemsize + out_itemsize)),
    )(xf, sums, ssqs, gamma_lane, beta_lane)


def _bn_fused(xf, gamma_lane, beta_lane, extra, *, n_rows, group, fold,
              vmem_limit, out_dtype):
    r, c_lane = xf.shape
    kernel = functools.partial(_bn_fused_kernel, n_rows=n_rows, group=group, fold=fold)
    return pl.pallas_call(
        kernel,
        out_shape=(jax.ShapeDtypeStruct((r, c_lane), out_dtype),
                   jax.ShapeDtypeStruct((1, c_lane), jnp.float32),
                   jax.ShapeDtypeStruct((1, c_lane), jnp.float32)),
        compiler_params=pltpu.CompilerParams(vmem_limit_bytes=vmem_limit),
    )(xf, gamma_lane, beta_lane, extra)


def _bias_fused(xf, bias_lane, *, vmem_limit, out_dtype):
    r, c_lane = xf.shape
    return pl.pallas_call(
        _bias_kernel,
        out_shape=jax.ShapeDtypeStruct((r, c_lane), out_dtype),
        compiler_params=pltpu.CompilerParams(vmem_limit_bytes=vmem_limit),
    )(xf, bias_lane)


def _bias_tiled(xf, bias_lane, *, tile_r, nt, vmem_limit, out_dtype):
    r, c_lane = xf.shape
    return pl.pallas_call(
        _bias_kernel,
        out_shape=jax.ShapeDtypeStruct((r, c_lane), out_dtype),
        grid=(nt,),
        in_specs=[pl.BlockSpec((tile_r, c_lane), lambda i: (i, 0)),
                  pl.BlockSpec((1, c_lane), lambda i: (0, 0))],
        out_specs=pl.BlockSpec((tile_r, c_lane), lambda i: (i, 0)),
        compiler_params=pltpu.CompilerParams(
            dimension_semantics=("parallel",),
            vmem_limit_bytes=vmem_limit),
    )(xf, bias_lane)


# ------------------------------ host wrapper -------------------------------- #

def _param_lane(p, fold, c_lane):
    p = p.astype(jnp.float32)
    if fold > 1:
        p = jnp.tile(p, fold)
    elif p.shape[0] != c_lane:
        p = jnp.pad(p, (0, c_lane - p.shape[0]))
    return p.reshape(1, c_lane)


@functools.partial(jax.jit, static_argnames=("use_bn", "force_two_pass"))
def batch_norm_block(x, gamma, beta, bias, *, use_bn=True, force_two_pass=False):
    """Forward of KPConv's BatchNormBlock. x: (N, C); gamma/beta/bias: (C,)."""
    n, c = x.shape
    out_dtype = x.dtype
    itemsize = jnp.dtype(x.dtype).itemsize

    # ---- lane-dense layout choice -------------------------------------------
    if c % 128 == 0:
        fold, c_lane = 1, c                      # already lane-aligned
    elif 128 % c == 0:
        fold, c_lane = 128 // c, 128             # fold rows into lanes, no padding
    else:
        fold, c_lane = 1, _ceil_to(c, 128)       # column-pad to a lane multiple
        # TODO(synk): for awkward C a masked full-C block layout may beat the
        # padded layout; needs a measurement before switching.

    n_main = (n // fold) * fold
    tail_n = n - n_main                          # < fold leftover rows
    r = n_main // fold

    if r == 0:                                   # degenerate: fewer rows than fold
        xf32 = x.astype(jnp.float32)
        if use_bn:
            mean = jnp.mean(xf32, axis=0, keepdims=True)
            var = jnp.mean(jnp.square(xf32 - mean), axis=0, keepdims=True)
            y = (xf32 - mean) * jax.lax.rsqrt(var + BN_EPS) * gamma + beta
        else:
            y = xf32 + bias
        return y.astype(out_dtype)

    if fold > 1:
        x_main = x if tail_n == 0 else x[:n_main]
        xf = x_main.reshape(r, c_lane)           # pure row fold (no pad copy)
        x_tail = None if tail_n == 0 else x[n_main:].astype(jnp.float32)
    else:
        xf = x if c_lane == c else jnp.pad(x, ((0, 0), (0, c_lane - c)))
        x_tail = None

    group = c_lane // fold                       # lanes per channel group

    # ---- arch-aware sizing ----------------------------------------------------
    vmem_cap = _vmem_capacity_bytes()
    xf_bytes = r * c_lane * itemsize
    use_fused = ((xf_bytes <= vmem_cap // 4) and not force_two_pass) or (r < 8)
    fused_vmem = min(int(vmem_cap * 3 // 4), 3 * xf_bytes + (8 << 20))
    tiled_vmem = vmem_cap // 2

    y_tail = None
    if use_bn:
        gamma_lane = _param_lane(gamma, fold, c_lane)
        beta_lane = _param_lane(beta, fold, c_lane)
        if use_fused:
            extra = jnp.zeros((2, c_lane), jnp.float32)
            if tail_n:
                extra = extra.at[0, :c].set(jnp.sum(x_tail, axis=0))
                extra = extra.at[1, :c].set(jnp.sum(x_tail * x_tail, axis=0))
            yf, scale_l, shift_l = _bn_fused(
                xf, gamma_lane, beta_lane, extra, n_rows=n, group=group,
                fold=fold, vmem_limit=fused_vmem, out_dtype=out_dtype)
            if tail_n:
                y_tail = (x_tail * scale_l[0, :c] + shift_l[0, :c]).astype(out_dtype)
        else:
            tile_r, nt = _pick_tile(r, c_lane, itemsize, vmem_cap)
            sums, ssqs = _bn_stats(xf, tile_r, nt, tiled_vmem)
            if tail_n:
                sums = sums.at[0, :c].add(jnp.sum(x_tail, axis=0))
                ssqs = ssqs.at[0, :c].add(jnp.sum(x_tail * x_tail, axis=0))
            yf = _bn_apply(xf, sums, ssqs, gamma_lane, beta_lane, n_rows=n,
                           group=group, fold=fold, tile_r=tile_r, nt=nt,
                           vmem_limit=tiled_vmem, out_dtype=out_dtype)
            if tail_n:
                # tiny (C,)-sized epilogue just for the < fold leftover rows
                tot_s = sums.sum(axis=0).reshape(fold, group).sum(axis=0)[:c]
                tot_q = ssqs.sum(axis=0).reshape(fold, group).sum(axis=0)[:c]
                mean = tot_s / n
                var = jnp.maximum(tot_q / n - mean * mean, 0.0)
                sc = gamma.astype(jnp.float32) * jax.lax.rsqrt(var + BN_EPS)
                sh = beta.astype(jnp.float32) - mean * sc
                y_tail = (x_tail * sc + sh).astype(out_dtype)
        # TODO(synk): BatchNorm1d running_mean/running_var momentum buffers are
        # not materialized; the forward output itself is exact.
    else:
        bias_lane = _param_lane(bias, fold, c_lane)
        if use_fused:
            yf = _bias_fused(xf, bias_lane, vmem_limit=fused_vmem,
                             out_dtype=out_dtype)
        else:
            tile_r, nt = _pick_tile(r, c_lane, itemsize, vmem_cap)
            yf = _bias_tiled(xf, bias_lane, tile_r=tile_r, nt=nt,
                             vmem_limit=tiled_vmem, out_dtype=out_dtype)
        if tail_n:
            y_tail = (x_tail + bias.astype(jnp.float32)[None, :]).astype(out_dtype)

    # ---- unfold lanes back to rows (free in the common, padding-free case) ---
    if fold > 1:
        y = yf.reshape(n_main, c)
        if tail_n:
            y = jnp.concatenate([y, y_tail], axis=0)
    else:
        y = yf if c_lane == c else yf[:, :c]
    return y


# ---------------------------------- test ------------------------------------ #

def _reference(x, gamma, beta, bias, use_bn):
    x = x.astype(jnp.float32)
    if use_bn:
        mean = jnp.mean(x, axis=0, keepdims=True)
        var = jnp.mean(jnp.square(x - mean), axis=0, keepdims=True)
        return (x - mean) / jnp.sqrt(var + BN_EPS) * gamma[None, :] + beta[None, :]
    return x + bias[None, :]


if __name__ == "__main__":
    key = jax.random.PRNGKey(0)
    kx, kg, kb, kc = jax.random.split(key, 4)

    cases = [
        # (N, C, use_bn, force_two_pass)
        (64, 32, True, False),    # lane-folded, fused single-read path
        (64, 32, False, False),   # bias-only path (fused)
        (61, 32, True, False),    # N % fold != 0 -> tiny plain-JAX tail
        (64, 32, True, True),     # exercise tiled two-pass (stats + apply) path
        (61, 32, False, True),    # tiled bias path with fold tail
        (64, 48, True, False),    # channel-padded layout branch
    ]

    ok = True
    for (n, c, use_bn, force) in cases:
        x = jax.random.normal(kx, (n, c), dtype=jnp.float32) * 1.7 + 0.4
        gamma = 1.0 + 0.1 * jax.random.normal(kg, (c,), dtype=jnp.float32)
        beta = 0.1 * jax.random.normal(kb, (c,), dtype=jnp.float32)
        bias = 0.1 * jax.random.normal(kc, (c,), dtype=jnp.float32)

        out = batch_norm_block(x, gamma, beta, bias, use_bn=use_bn,
                               force_two_pass=force)
        out = jax.block_until_ready(out)
        ref = _reference(x, gamma, beta, bias, use_bn)
        ok = ok and bool(jnp.allclose(out, ref, atol=3e-5, rtol=3e-5))

    print("KERNEL_OK" if ok else "MISMATCH")
</pallas_src>

<mosaic_0001>
module attributes {stable_mosaic.version = 11 : i64} {
  func.func @_bn_fused_kernel(%arg0: memref<16x128xf32, #tpu.memory_space<vmem>>, %arg1: memref<1x128xf32, #tpu.memory_space<vmem>>, %arg2: memref<1x128xf32, #tpu.memory_space<vmem>>, %arg3: memref<2x128xf32, #tpu.memory_space<vmem>>, %arg4: memref<16x128xf32, #tpu.memory_space<vmem>>, %arg5: memref<1x128xf32, #tpu.memory_space<vmem>>, %arg6: memref<1x128xf32, #tpu.memory_space<vmem>>) attributes {dimension_semantics = [], scalar_prefetch = 0 : i64, scratch_operands = 0 : i64, tpu.core_type = #tpu.core_type<tc>} {
    %c0 = arith.constant 0 : index
    %c0_0 = arith.constant 0 : index
    %0 = vector.load %arg0[%c0, %c0_0] : memref<16x128xf32, #tpu.memory_space<vmem>>, vector<16x128xf32>
    %cst = arith.constant dense<0.000000e+00> : vector<128xf32>
    %1 = vector.multi_reduction <add>, %0, %cst [0] : vector<16x128xf32> to vector<128xf32>
    %2 = vector.shape_cast %1 : vector<128xf32> to vector<1x128xf32>
    %c0_1 = arith.constant 0 : index
    %c0_2 = arith.constant 0 : index
    %3 = vector.load %arg3[%c0_1, %c0_2] : memref<2x128xf32, #tpu.memory_space<vmem>>, vector<1x128xf32>
    %4 = arith.addf %2, %3 : vector<1x128xf32>
    %5 = arith.mulf %0, %0 : vector<16x128xf32>
    %cst_3 = arith.constant dense<0.000000e+00> : vector<128xf32>
    %6 = vector.multi_reduction <add>, %5, %cst_3 [0] : vector<16x128xf32> to vector<128xf32>
    %7 = vector.shape_cast %6 : vector<128xf32> to vector<1x128xf32>
    %c1 = arith.constant 1 : index
    %c0_4 = arith.constant 0 : index
    %8 = vector.load %arg3[%c1, %c0_4] : memref<2x128xf32, #tpu.memory_space<vmem>>, vector<1x128xf32>
    %9 = arith.addf %7, %8 : vector<1x128xf32>
    %c0_5 = arith.constant 0 : index
    %c0_6 = arith.constant 0 : index
    %10 = vector.load %arg1[%c0_5, %c0_6] : memref<1x128xf32, #tpu.memory_space<vmem>>, vector<1x128xf32>
    %c0_7 = arith.constant 0 : index
    %c0_8 = arith.constant 0 : index
    %11 = vector.load %arg2[%c0_7, %c0_8] : memref<1x128xf32, #tpu.memory_space<vmem>>, vector<1x128xf32>
    %c64_i32 = arith.constant 64 : i32
    %12 = tpu.dynamic_rotate %4 by %c64_i32 dim 1 : vector<1x128xf32>, i32 -> vector<1x128xf32>
    %13 = arith.addf %4, %12 : vector<1x128xf32>
    %c64_i32_9 = arith.constant 64 : i32
    %14 = tpu.dynamic_rotate %9 by %c64_i32_9 dim 1 : vector<1x128xf32>, i32 -> vector<1x128xf32>
    %15 = arith.addf %9, %14 : vector<1x128xf32>
    %c32_i32 = arith.constant 32 : i32
    %16 = tpu.dynamic_rotate %13 by %c32_i32 dim 1 : vector<1x128xf32>, i32 -> vector<1x128xf32>
    %17 = arith.addf %13, %16 : vector<1x128xf32>
    %c32_i32_10 = arith.constant 32 : i32
    %18 = tpu.dynamic_rotate %15 by %c32_i32_10 dim 1 : vector<1x128xf32>, i32 -> vector<1x128xf32>
    %19 = arith.addf %15, %18 : vector<1x128xf32>
    %cst_11 = arith.constant 1.562500e-02 : f32
    %20 = vector.broadcast %cst_11 : f32 to vector<1x128xf32>
    %21 = arith.mulf %17, %20 : vector<1x128xf32>
    %cst_12 = arith.constant 1.562500e-02 : f32
    %22 = vector.broadcast %cst_12 : f32 to vector<1x128xf32>
    %23 = arith.mulf %19, %22 : vector<1x128xf32>
    %24 = arith.mulf %21, %21 : vector<1x128xf32>
    %25 = arith.subf %23, %24 : vector<1x128xf32>
    %cst_13 = arith.constant 0.000000e+00 : f32
    %26 = vector.broadcast %cst_13 : f32 to vector<1x128xf32>
    %27 = arith.maximumf %25, %26 : vector<1x128xf32>
    %cst_14 = arith.constant 9.99999974E-6 : f32
    %28 = vector.broadcast %cst_14 : f32 to vector<1x128xf32>
    %29 = arith.addf %27, %28 : vector<1x128xf32>
    %30 = math.rsqrt %29 : vector<1x128xf32>
    %31 = arith.mulf %10, %30 : vector<1x128xf32>
    %32 = arith.mulf %21, %31 : vector<1x128xf32>
    %33 = arith.subf %11, %32 : vector<1x128xf32>
    %34 = vector.broadcast %31 : vector<1x128xf32> to vector<16x128xf32>
    %35 = arith.mulf %0, %34 : vector<16x128xf32>
    %36 = vector.broadcast %33 : vector<1x128xf32> to vector<16x128xf32>
    %37 = arith.addf %35, %36 : vector<16x128xf32>
    %c0_15 = arith.constant 0 : index
    %c0_16 = arith.constant 0 : index
    %38 = vector.load %arg4[%c0_15, %c0_16] : memref<16x128xf32, #tpu.memory_space<vmem>>, vector<16x128xf32>
    tpu.vector_store %arg4[%c0_15, %c0_16], %37 {strides = array<i32>} : memref<16x128xf32, #tpu.memory_space<vmem>>, vector<16x128xf32>,
    %c0_17 = arith.constant 0 : index
    %c0_18 = arith.constant 0 : index
    %39 = vector.load %arg5[%c0_17, %c0_18] : memref<1x128xf32, #tpu.memory_space<vmem>>, vector<1x128xf32>
    tpu.vector_store %arg5[%c0_17, %c0_18], %31 {strides = array<i32>} : memref<1x128xf32, #tpu.memory_space<vmem>>, vector<1x128xf32>,
    %c0_19 = arith.constant 0 : index
    %c0_20 = arith.constant 0 : index
    %40 = vector.load %arg6[%c0_19, %c0_20] : memref<1x128xf32, #tpu.memory_space<vmem>>, vector<1x128xf32>
    tpu.vector_store %arg6[%c0_19, %c0_20], %33 {strides = array<i32>} : memref<1x128xf32, #tpu.memory_space<vmem>>, vector<1x128xf32>,
    return
  }
}

</mosaic_0001>

<llo_original>
// kernel: tile.14
$region0: #{tile.14}
  %s0 = inlined_call_operand.vmem [shape: f32[4,32], index: 0, kind: input, shape index: {}]
  %s1 = inlined_call_operand.vmem [shape: f32[1,128], index: 1, kind: output, shape index: {}]
  $region1: #{tile.14} parent=0
    #allocation0 [shape = 'u8[4096]{0}', space=vmem, size = 0x1000, scoped, tag = 'scoped mem for output reshape']
    #allocation1 [shape = 'u8[4096]{0}', space=vmem, size = 0x1000, scoped, tag = 'scoped mem for input reshape']
    %s3 = sshll.u32 1, 4
    %s4 = ssub.s32 %s3, 1
    %v5 = vld [vmem:[%s0] sm:%s4]
    %6 = vst [vmem:[#allocation1] sm:%s4] %v5
    %v7 = vld [vmem:[#allocation1] sm:$0x1]
    %vm8 = vcmask 261120
    %9 = vst.msk [vmem:[#allocation0] sm:$0x1] %vm8, %v7
    %s10 = scalar_lea.vmem [#allocation1], 3
    %v11 = vld [vmem:[%s10] sm:$0x1]
    %12 = vrot.lane.b32.xlu0 %v11, 96
    %v13 = vpop.permute.xlu0 %12
    %vm14 = vcmask 1048320
    %15 = vst.msk [vmem:[#allocation0] sm:$0x1] %vm14, %v13
    %s16 = scalar_lea.vmem [#allocation1], 2
    %v17 = vld [vmem:[%s16] sm:$0x1]
    %18 = vrot.lane.b32.xlu0 %v17, 64
    %v19 = vpop.permute.xlu0 %18
    %vm20 = vcmask 785920
    %21 = vst.msk [vmem:[#allocation0] sm:$0x1] %vm20, %v19
    %s22 = scalar_lea.vmem [#allocation1], 1
    %v23 = vld [vmem:[%s22] sm:$0x1]
    %24 = vrot.lane.b32.xlu0 %v23, 32
    %v25 = vpop.permute.xlu0 %24
    %vm26 = vcmask 523520
    %27 = vst.msk [vmem:[#allocation0] sm:$0x1] %vm26, %v25
    %s29 = sshll.u32 1, 1
    %s30 = ssub.s32 %s29, 1
    %v32 = vld [vmem:[#allocation0] sm:%s30]
    %s33 = sshll.u32 1, 1
    %s34 = ssub.s32 %s33, 1
    %35 = vst [vmem:[%s1] sm:%s34] %v32

// kernel: tile.13
$region0: #{tile.13}
  #allocation0 [shape = 's32[1]{0}', space=sflag, size = 0x4, scoped, tag = 'scoped memory for tile.13']
  %s0 = inlined_call_operand.vmem [shape: f32[32], index: 0, kind: input, shape index: {}]
  %s1 = inlined_call_operand.vmem [shape: f32[4,32], index: 1, kind: output, shape index: {}]
  // Predicated region
  $region2: #{tile.13} parent=0 // pred_check
    _
  $region3: #{tile.13} parent=0 // pred_check_branch
    %3 = sbr.rel (0) target = $region5
  $region4: #{tile.13} parent=0 // pred_region
    _
  $region5: #{tile.13} parent=0 // pred_fallthru
    _
  %v4 = vld [vmem:[%s0] ss:$0 sm:$0xff]
  %5 = vst [vmem:[%s1] sm:$0xf] %v4

// kernel: batch_norm_block.1
$region0: #{batch_norm_block.1}
  #allocation0 [shape = 'u32[]', space=smem, size = 0x4, offset = 0x4, fixed_abs, tag = 'smem constant byte address 0x4 - core index']
  #allocation1 [shape = 'u32[144,128]{1,0:T(1,128)}', space=vmem, size = 0x12000, scoped, tag = 'internal scratch']
  %s0 = inlined_call_operand.vmem [shape: f32[16,128], index: 0, kind: input, shape index: {}]
  %s1 = inlined_call_operand.vmem [shape: f32[1,128], index: 1, kind: input, shape index: {}]
  %s2 = inlined_call_operand.vmem [shape: f32[1,128], index: 2, kind: input, shape index: {}]
  %s3 = inlined_call_operand.vmem [shape: f32[2,128], index: 3, kind: input, shape index: {}]
  %s4 = inlined_call_operand.vmem [shape: f32[16,128], index: 4, kind: output, shape index: {0}]
  %s5 = inlined_call_operand.hbm [shape: f32[1,128], index: 5, kind: output, shape index: {1}]
  %s6 = inlined_call_operand.hbm [shape: f32[1,128], index: 6, kind: output, shape index: {2}]
  %7 = xla_tuple %s4, %s5, %s6
  %s8 = sld [smem:[#allocation0]]
  $region42: #{batch_norm_block.1} parent=0
    _
  %s10 = ssub.s32 1, %s8
  %s11 = scalar_select 0, %s10, %s8
  $region1: #{batch_norm_block.1} parent=0
    #allocation2 [shape = 'u8[512]{0}', space=vmem, size = 0x400, scoped, tag = 'output window, operand 1, single buffered']
    #allocation3 [shape = 's32[1]{0}', space=sflag, size = 0x4, scoped, tag = 'scoped memory for batch_norm_block.1']
    #allocation4 [shape = 'u8[512]{0}', space=vmem, size = 0x400, scoped, tag = 'output window, operand 2, single buffered']
    #allocation5 [shape = 's32[1]{0}', space=sflag, size = 0x4, scoped, tag = 'scoped memory for batch_norm_block.1']
    %12 = vsyncpa [#allocation3], 0
    %13 = vsyncpa [#allocation5], 0
    // Predicated region
    $region2: #{batch_norm_block.1} parent=1 // pred_check
      _
    $region3: #{batch_norm_block.1} parent=1 // pred_check_branch
      %15 = sbr.rel (0) target = $region5
    $region4: #{batch_norm_block.1} parent=1 // pred_region
      _
    $region5: #{batch_norm_block.1} parent=1 // pred_fallthru
      _
    // Predicated region
    $region6: #{batch_norm_block.1} parent=1 // pred_check
      _
    $region7: #{batch_norm_block.1} parent=1 // pred_check_branch
      %17 = sbr.rel (0) target = $region9
    $region8: #{batch_norm_block.1} parent=1 // pred_region
      _
    $region9: #{batch_norm_block.1} parent=1 // pred_fallthru
      _
    // Predicated region
    $region10: #{batch_norm_block.1} parent=1 // pred_check
      _
    $region11: #{batch_norm_block.1} parent=1 // pred_check_branch
      %19 = sbr.rel (0) target = $region13
    $region12: #{batch_norm_block.1} parent=1 // pred_region
      _
    $region13: #{batch_norm_block.1} parent=1 // pred_fallthru
      _
    // Predicated region
    $region14: #{batch_norm_block.1} parent=1 // pred_check
      _
    $region15: #{batch_norm_block.1} parent=1 // pred_check_branch
      %21 = sbr.rel (0) target = $region17
    $region16: #{batch_norm_block.1} parent=1 // pred_region
      _
    $region17: #{batch_norm_block.1} parent=1 // pred_fallthru
      _
    %v22 = vld [vmem:[%s0] sm:$0xff]
    %v23 = vld [vmem:[%s0 + $0x8] sm:$0xff]
    %v24 = vadd.f32 %v22, %v23
    %v25 = vrot.slane %v24, 4
    %v26 = vadd.f32 %v24, %v25
    %v27 = vrot.slane %v26, 2
    %v28 = vadd.f32 %v26, %v27
    %v29 = vrot.slane %v28, 1
    %v30 = vadd.f32 %v28, %v29
    %v31 = vld [vmem:[%s3] sm:$0x1]
    %v32 = vadd.f32 %v30, %v31
    %v33 = vmul.f32 %v22, %v22
    %v34 = vmul.f32 %v23, %v23
    %v35 = vadd.f32 %v33, %v34
    %v36 = vrot.slane %v35, 4
    %v37 = vadd.f32 %v35, %v36
    %v38 = vrot.slane %v37, 2
    %v39 = vadd.f32 %v37, %v38
    %v40 = vrot.slane %v39, 1
    %v41 = vadd.f32 %v39, %v40
    %v42 = vld [vmem:[%s3 + $0x1] sm:$0x1]
    %v43 = vadd.f32 %v41, %v42
    %v44 = vld [vmem:[%s1] sm:$0x1]
    %v45 = vld [vmem:[%s2] sm:$0x1]
    %46 = vrot.lane.b32.xlu0 %v32, 64
    %v47 = vpop.permute.xlu0 %46
    %v48 = vadd.f32 %v32, %v47
    %49 = vrot.lane.b32.xlu0 %v43, 64
    %v50 = vpop.permute.xlu0 %49
    %v51 = vadd.f32 %v43, %v50
    %52 = vrot.lane.b32.xlu0 %v48, 32
    %v53 = vpop.permute.xlu0 %52
    %v54 = vadd.f32 %v48, %v53
    %55 = vrot.lane.b32.xlu0 %v51, 32
    %v56 = vpop.permute.xlu0 %55
    %v57 = vadd.f32 %v51, %v56
    %v58 = vmul.f32 %v54, 0.015625
    %v59 = vmul.f32 %v57, 0.015625
    %v60 = vmul.f32 %v58, %v58
    %v61 = vsub.f32 %v59, %v60
    %v62 = vmax.f32 %v61, 0.0
    %v63 = vadd.f32 %v62, 1e-05
    %v64 = vrsqrt.pop %v63
    %v65 = vmul.f32 %v44, %v64
    %v66 = vmul.f32 %v58, %v65
    %v67 = vsub.f32 %v45, %v66
    %v69 = vlaneseq
    %v70 = vshrl.u32 %v69, 7
    %v71 = vsub.s32 0, %v70
    %v72 = vrot.slane %v65, %v71
    %v74 = vmul.f32 %v22, %v72
    %v75 = vmul.f32 %v23, %v72
    %v77 = vlaneseq
    %v78 = vshrl.u32 %v77, 7
    %v79 = vsub.s32 0, %v78
    %v80 = vrot.slane %v67, %v79
    %v82 = vadd.f32 %v74, %v80
    %v83 = vadd.f32 %v75, %v80
    %84 = vst [vmem:[%s4] sm:$0xff] %v82
    %85 = vst [vmem:[%s4 + $0x8] sm:$0xff] %v83
    %86 = vst [vmem:[#allocation2] sm:$0x1] %v65
    %87 = vst [vmem:[#allocation4] sm:$0x1] %v67
    // Predicated region
    $region18: #{batch_norm_block.1} parent=1 // pred_check
      _
    $region19: #{batch_norm_block.1} parent=1 // pred_check_branch
      %89 = sbr.rel (0) target = $region21
    $region20: #{batch_norm_block.1} parent=1 // pred_region
      _
    $region21: #{batch_norm_block.1} parent=1 // pred_fallthru
      _
    // Predicated region
    $region22: #{batch_norm_block.1} parent=1 // pred_check
      _
    $region23: #{batch_norm_block.1} parent=1 // pred_check_branch
      %91 = sbr.rel (0) target = $region25
    $region24: #{batch_norm_block.1} parent=1 // pred_region
      %s93 = ssub.s32 16, 16
      %94 = vsyncadd [#allocation3], %s93
      %s96 = sshll.u32 [#allocation2], 4
      %s97 = int_to_ptr.vmem [resolvable:$true] %s96
      %99 = dma.vmem_to_hbm [thread:$0]  %s97, 16, %s5, [#allocation3]
    $region25: #{batch_norm_block.1} parent=1 // pred_fallthru
      _
    // Predicated region
    $region26: #{batch_norm_block.1} parent=1 // pred_check
      _
    $region27: #{batch_norm_block.1} parent=1 // pred_check_branch
      %101 = sbr.rel (0) target = $region29
    $region28: #{batch_norm_block.1} parent=1 // pred_region
      %s103 = ssub.s32 16, 16
      %104 = vsyncadd [#allocation5], %s103
      %s106 = sshll.u32 [#allocation4], 4
      %s107 = int_to_ptr.vmem [resolvable:$true] %s106
      %109 = dma.vmem_to_hbm [thread:$0]  %s107, 16, %s6, [#allocation5]
    $region29: #{batch_norm_block.1} parent=1 // pred_fallthru
      _
    // Predicated region
    $region30: #{batch_norm_block.1} parent=1 // pred_check
      _
    $region31: #{batch_norm_block.1} parent=1 // pred_check_branch
      %111 = sbr.rel (0) target = $region33
    $region32: #{batch_norm_block.1} parent=1 // pred_region
      _
    $region33: #{batch_norm_block.1} parent=1 // pred_fallthru
      _
    // Predicated region
    $region34: #{batch_norm_block.1} parent=1 // pred_check
      _
    $region35: #{batch_norm_block.1} parent=1 // pred_check_branch
      %113 = sbr.rel (0) target = $region37
    $region36: #{batch_norm_block.1} parent=1 // pred_region
      %114 = dma.done [#allocation3], 16
    $region37: #{batch_norm_block.1} parent=1 // pred_fallthru
      _
    // Predicated region
    $region38: #{batch_norm_block.1} parent=1 // pred_check
      _
    $region39: #{batch_norm_block.1} parent=1 // pred_check_branch
      %116 = sbr.rel (0) target = $region41
    $region40: #{batch_norm_block.1} parent=1 // pred_region
      %117 = dma.done [#allocation5], 16
    $region41: #{batch_norm_block.1} parent=1 // pred_fallthru
      _
    %118 = vsyncpa [#allocation3], 1
    %119 = vsyncpa [#allocation5], 1

</llo_original>
